<compile_context>
chip_gen: v7x
topology: tpu7x:2x2x1
jax: 0.10.0
libtpu: 0.0.40
codegen_flags: <defaults>
</compile_context>

<pallas_src>
import jax
import jax.numpy as jnp
from jax.experimental import pallas as pl
from jax.experimental.pallas import tpu as pltpu


def _round_up(x, m):
    return ((x + m - 1) // m) * m


def _choose_tile_c(C, H, B, vmem_budget_bytes=16 << 20):
    """Largest multiple-of-128 output tile whose double-buffered streamed VMEM fits the budget."""
    # Per output lane (double-buffered): who bf16 (2H) + b_o f32 (4) + logit f32 (4B).
    bytes_per_lane = 2 * (2 * H + 4 + 4 * B)
    tile = max(128, (vmem_budget_bytes // bytes_per_lane) // 128 * 128)
    return int(min(tile, _round_up(C, 128)))


# --------------------------------------------------------------------------------------
# Kernel 1: single-step GRU cell (runs once, no grid).
# --------------------------------------------------------------------------------------
def gru_cell_kernel(rows_ref,       # (B, 3, H) f32  gathered W_ih item rows
                    times_ref,      # (B, 1)    f32
                    wih_time_ref,   # (3, 1, H) f32  time column of W_ih (gate-major)
                    b_ih_ref,       # (3, 1, H) f32
                    h0_ref,         # (B, H)    f32
                    whh_ref,        # (3, H, H) bf16 (W_hh_g^T, gate-major)
                    b_hh_ref,       # (3, 1, H) f32
                    hnew_ref,       # out (B, H) f32
                    hnew_bf_ref):   # out (B, H) bf16 (reused by every projection tile)
    h = h0_ref[...]                               # (B, H) f32
    h_bf = h.astype(jnp.bfloat16)
    t = times_ref[...]                            # (B, 1) f32
    rows = rows_ref[...]                          # (B, 3, H) f32

    def gate(g):
        gi = rows[:, g, :] + t * wih_time_ref[g] + b_ih_ref[g]                 # (B, H)
        gh = (jnp.dot(h_bf, whh_ref[g], preferred_element_type=jnp.float32)
              + b_hh_ref[g])                                                   # (B, H)
        return gi, gh

    gi_r, gh_r = gate(0)
    gi_z, gh_z = gate(1)
    gi_n, gh_n = gate(2)

    r = jax.nn.sigmoid(gi_r + gh_r)
    z = jax.nn.sigmoid(gi_z + gh_z)
    n = jnp.tanh(gi_n + r * gh_n)                 # b_hh already inside gh_n (PyTorch GRU)
    h_new = (1.0 - z) * n + z * h

    hnew_ref[...] = h_new
    hnew_bf_ref[...] = h_new.astype(jnp.bfloat16)


# --------------------------------------------------------------------------------------
# Kernel 2: h2o projection, tiled over C, grid axis "parallel" (megacore on v7x).
# --------------------------------------------------------------------------------------
def h2o_kernel(h_ref,       # (B, H)        bf16
               who_ref,     # (H, TILE_C)   bf16
               b_ref,       # (1, TILE_C)   f32
               logit_ref):  # (B, TILE_C)   f32
    logit_ref[...] = jnp.tanh(
        jnp.dot(h_ref[...], who_ref[...], preferred_element_type=jnp.float32)
        + b_ref[...])


# --------------------------------------------------------------------------------------
# Wrapper
# --------------------------------------------------------------------------------------
def gru4rec_forward(params, item_idx, times, hidden):
    """item_idx: (B,) int, times: (B,) float, hidden: (1, B, H). Returns (logit (B,C), hidden')."""
    B = item_idx.shape[0]
    H = params["whh"].shape[1]
    C = params["n_items"]
    TILE_C = params["tile_c"]
    who_p = params["who_t_pad"]                    # (H, C_pad) bf16, pre-padded once
    b_o_p = params["b_o_pad"]                      # (1, C_pad) f32,  pre-padded once
    C_pad = who_p.shape[1]
    assert C_pad % TILE_C == 0
    n_tiles = C_pad // TILE_C

    # One-hot(x) @ W_ih  ==  row gather of W_ih; do it as a cheap XLA gather (clamped, like jnp).
    idx = jnp.clip(item_idx.astype(jnp.int32), 0, C - 1)
    rows = jnp.take(params["wih_item"], idx, axis=0)          # (B, 3, H) f32
    t2 = times.reshape(B, 1).astype(jnp.float32)
    h0 = hidden[0].astype(jnp.float32)

    # --- GRU cell: one tiny grid-less kernel -------------------------------------------
    h_new, h_new_bf = pl.pallas_call(
        gru_cell_kernel,
        out_shape=(jax.ShapeDtypeStruct((B, H), jnp.float32),
                   jax.ShapeDtypeStruct((B, H), jnp.bfloat16)),
    )(rows, t2, params["wih_time"], params["b_ih"], h0, params["whh"], params["b_hh"])

    # --- h2o projection: lane-dense C tiles, parallel grid axis ------------------------
    logit_pad = pl.pallas_call(
        h2o_kernel,
        out_shape=jax.ShapeDtypeStruct((B, C_pad), jnp.float32),
        grid_spec=pl.GridSpec(
            grid=(n_tiles,),
            in_specs=[
                pl.BlockSpec((B, H), lambda c: (0, 0)),            # h_new (bf16, tiny)
                pl.BlockSpec((H, TILE_C), lambda c: (0, c)),       # W_h2o^T tile (bf16)
                pl.BlockSpec((1, TILE_C), lambda c: (0, c)),       # b_h2o tile
            ],
            out_specs=pl.BlockSpec((B, TILE_C), lambda c: (0, c)),
        ),
        compiler_params=pltpu.CompilerParams(
            dimension_semantics=("parallel",),
            vmem_limit_bytes=32 << 20),
    )(h_new_bf, who_p, b_o_p)

    return logit_pad[:, :C], h_new[None]


# --------------------------------------------------------------------------------------
# Parameters (deterministic synthetic, nn.GRU / nn.Linear shapes, restructured gate-major)
# --------------------------------------------------------------------------------------
def init_params(key, n_items, hidden_size, batch_size):
    C = n_items                      # output_size == input_size (pre +1)
    In = C + 1                       # GRU input width (one-hot + time)
    H = hidden_size
    ks = jax.random.split(key, 6)
    bound = 1.0 / jnp.sqrt(H)
    w_ih = jax.random.uniform(ks[0], (3 * H, In), jnp.float32, -bound, bound)
    w_hh = jax.random.uniform(ks[1], (3 * H, H), jnp.float32, -bound, bound)
    b_ih = jax.random.uniform(ks[2], (3 * H,), jnp.float32, -bound, bound)
    b_hh = jax.random.uniform(ks[3], (3 * H,), jnp.float32, -bound, bound)
    w_o = jax.random.uniform(ks[4], (C, H), jnp.float32, -bound, bound)
    b_o = jax.random.uniform(ks[5], (C,), jnp.float32, -bound, bound)

    # Pre-pad the output projection ONCE to a TILE_C multiple (tile chosen from VMEM budget).
    TILE_C = _choose_tile_c(C, H, batch_size)
    C_pad = _round_up(C, TILE_C)
    who_t_pad = jnp.zeros((H, C_pad), jnp.bfloat16).at[:, :C].set(w_o.T.astype(jnp.bfloat16))
    b_o_pad = jnp.zeros((1, C_pad), jnp.float32).at[:, :C].set(b_o[None, :])

    return {
        # per-item gate-major rows: wih_item[c, g, :] == W_ih[g*H:(g+1)*H, c]
        "wih_item": w_ih[:, :C].reshape(3, H, C).transpose(2, 0, 1),             # (C, 3, H) f32
        "wih_time": w_ih[:, C].reshape(3, H)[:, None, :],                        # (3, 1, H) f32
        "b_ih": b_ih.reshape(3, 1, H),                                           # (3, 1, H) f32
        # whh[g] = W_hh_g^T so that gh_g = h @ whh[g]
        "whh": w_hh.reshape(3, H, H).transpose(0, 2, 1).astype(jnp.bfloat16),    # (3, H, H) bf16
        "b_hh": b_hh.reshape(3, 1, H),                                           # (3, 1, H) f32
        "who_t_pad": who_t_pad,                                                  # (H, C_pad) bf16
        "b_o_pad": b_o_pad,                                                      # (1, C_pad) f32
        "n_items": C,                                                            # python int
        "tile_c": TILE_C,                                                        # python int
    }


# --------------------------------------------------------------------------------------
# Pure-JAX reference mirroring the PyTorch forward (same bf16/f32 mixed precision)
# --------------------------------------------------------------------------------------
def reference_forward(params, item_idx, times, hidden):
    B = item_idx.shape[0]
    C = params["n_items"]
    h = hidden[0]
    h_bf = h.astype(jnp.bfloat16)
    t = times.reshape(B, 1)
    rows = params["wih_item"][item_idx]            # (B, 3, H) -- one-hot matmul == row gather

    def gate(g):
        gi = rows[:, g, :] + t * params["wih_time"][g] + params["b_ih"][g]
        gh = (jnp.dot(h_bf, params["whh"][g], preferred_element_type=jnp.float32)
              + params["b_hh"][g])
        return gi, gh

    gi_r, gh_r = gate(0)
    gi_z, gh_z = gate(1)
    gi_n, gh_n = gate(2)
    r = jax.nn.sigmoid(gi_r + gh_r)
    z = jax.nn.sigmoid(gi_z + gh_z)
    n = jnp.tanh(gi_n + r * gh_n)
    h_new = (1.0 - z) * n + z * h
    logit = jnp.tanh(jnp.dot(h_new.astype(jnp.bfloat16), params["who_t_pad"],
                             preferred_element_type=jnp.float32) + params["b_o_pad"])
    return logit[:, :C], h_new[None]


if __name__ == "__main__":
    B = 8            # batch_size (session-parallel mini-batch)
    n_items = 200    # input_size == output_size -> padded to one 256-wide lane-dense tile
    H = 32           # hidden_size

    key = jax.random.PRNGKey(0)
    k_par, k_idx, k_time, k_hid = jax.random.split(key, 4)
    params = init_params(k_par, n_items, H, B)

    item_idx = jax.random.randint(k_idx, (B,), 0, n_items, dtype=jnp.int32)
    times = jax.random.uniform(k_time, (B,), jnp.float32)
    hidden0 = jax.random.normal(k_hid, (1, B, H), jnp.float32)   # num_layers = 1

    logit, hidden1 = gru4rec_forward(params, item_idx, times, hidden0)
    jax.block_until_ready((logit, hidden1))

    ref_logit, ref_hidden1 = reference_forward(params, item_idx, times, hidden0)
    assert logit.shape == (B, n_items) and hidden1.shape == (1, B, H)
    assert jnp.allclose(logit, ref_logit, atol=1e-4, rtol=1e-4)
    assert jnp.allclose(hidden1, ref_hidden1, atol=1e-4, rtol=1e-4)
    print("KERNEL_OK")
</pallas_src>

<mosaic_0001>
module attributes {stable_mosaic.version = 11 : i64} {
  func.func @gru_cell_kernel(%arg0: memref<8x3x32xf32, #tpu.memory_space<vmem>>, %arg1: memref<8x1xf32, #tpu.memory_space<vmem>>, %arg2: memref<3x1x32xf32, #tpu.memory_space<vmem>>, %arg3: memref<3x1x32xf32, #tpu.memory_space<vmem>>, %arg4: memref<8x32xf32, #tpu.memory_space<vmem>>, %arg5: memref<3x32x32xbf16, #tpu.memory_space<vmem>>, %arg6: memref<3x1x32xf32, #tpu.memory_space<vmem>>, %arg7: memref<8x32xf32, #tpu.memory_space<vmem>>, %arg8: memref<8x32xbf16, #tpu.memory_space<vmem>>) attributes {dimension_semantics = [], scalar_prefetch = 0 : i64, scratch_operands = 0 : i64, tpu.core_type = #tpu.core_type<tc>} {
    %c0 = arith.constant 0 : index
    %c0_0 = arith.constant 0 : index
    %0 = vector.load %arg4[%c0, %c0_0] : memref<8x32xf32, #tpu.memory_space<vmem>>, vector<8x32xf32>
    %1 = arith.truncf %0 : vector<8x32xf32> to vector<8x32xbf16>
    %c0_1 = arith.constant 0 : index
    %c0_2 = arith.constant 0 : index
    %2 = vector.load %arg1[%c0_1, %c0_2] : memref<8x1xf32, #tpu.memory_space<vmem>>, vector<8x1xf32>
    %c0_3 = arith.constant 0 : index
    %c0_4 = arith.constant 0 : index
    %c0_5 = arith.constant 0 : index
    %3 = vector.load %arg0[%c0_3, %c0_4, %c0_5] : memref<8x3x32xf32, #tpu.memory_space<vmem>>, vector<8x3x32xf32>
    %4 = vector.extract_strided_slice %3 {offsets = [0, 0, 0], sizes = [8, 1, 32], strides = [1, 1, 1]} : vector<8x3x32xf32> to vector<8x1x32xf32>
    %5 = vector.shape_cast %4 : vector<8x1x32xf32> to vector<8x32xf32>
    %c0_6 = arith.constant 0 : index
    %c0_7 = arith.constant 0 : index
    %c0_8 = arith.constant 0 : index
    %6 = vector.load %arg2[%c0_6, %c0_7, %c0_8] : memref<3x1x32xf32, #tpu.memory_space<vmem>>, vector<1x1x32xf32>
    %7 = vector.shape_cast %6 : vector<1x1x32xf32> to vector<1x32xf32>
    %8 = vector.broadcast %2 : vector<8x1xf32> to vector<8x32xf32>
    %9 = vector.broadcast %7 : vector<1x32xf32> to vector<8x32xf32>
    %10 = arith.mulf %8, %9 : vector<8x32xf32>
    %11 = arith.addf %5, %10 : vector<8x32xf32>
    %c0_9 = arith.constant 0 : index
    %c0_10 = arith.constant 0 : index
    %c0_11 = arith.constant 0 : index
    %12 = vector.load %arg3[%c0_9, %c0_10, %c0_11] : memref<3x1x32xf32, #tpu.memory_space<vmem>>, vector<1x1x32xf32>
    %13 = vector.shape_cast %12 : vector<1x1x32xf32> to vector<1x32xf32>
    %14 = vector.broadcast %13 : vector<1x32xf32> to vector<8x32xf32>
    %15 = arith.addf %11, %14 : vector<8x32xf32>
    %c0_12 = arith.constant 0 : index
    %c0_13 = arith.constant 0 : index
    %c0_14 = arith.constant 0 : index
    %16 = vector.load %arg5[%c0_12, %c0_13, %c0_14] : memref<3x32x32xbf16, #tpu.memory_space<vmem>>, vector<1x32x32xbf16>
    %17 = vector.shape_cast %16 : vector<1x32x32xbf16> to vector<32x32xbf16>
    %cst = arith.constant dense<0.000000e+00> : vector<8x32xf32>
    %18 = tpu.matmul %1, %17, %cst {dimension_numbers = #tpu.dot_dimension_numbers<[1], [0], [0], [1], [0, 0, 1, 1], [], []>} : vector<8x32xbf16>, vector<32x32xbf16>, vector<8x32xf32> -> vector<8x32xf32>
    %c0_15 = arith.constant 0 : index
    %c0_16 = arith.constant 0 : index
    %c0_17 = arith.constant 0 : index
    %19 = vector.load %arg6[%c0_15, %c0_16, %c0_17] : memref<3x1x32xf32, #tpu.memory_space<vmem>>, vector<1x1x32xf32>
    %20 = vector.shape_cast %19 : vector<1x1x32xf32> to vector<1x32xf32>
    %21 = vector.broadcast %20 : vector<1x32xf32> to vector<8x32xf32>
    %22 = arith.addf %18, %21 : vector<8x32xf32>
    %23 = vector.extract_strided_slice %3 {offsets = [0, 1, 0], sizes = [8, 1, 32], strides = [1, 1, 1]} : vector<8x3x32xf32> to vector<8x1x32xf32>
    %24 = vector.shape_cast %23 : vector<8x1x32xf32> to vector<8x32xf32>
    %c1 = arith.constant 1 : index
    %c0_18 = arith.constant 0 : index
    %c0_19 = arith.constant 0 : index
    %25 = vector.load %arg2[%c1, %c0_18, %c0_19] : memref<3x1x32xf32, #tpu.memory_space<vmem>>, vector<1x1x32xf32>
    %26 = vector.shape_cast %25 : vector<1x1x32xf32> to vector<1x32xf32>
    %27 = vector.broadcast %2 : vector<8x1xf32> to vector<8x32xf32>
    %28 = vector.broadcast %26 : vector<1x32xf32> to vector<8x32xf32>
    %29 = arith.mulf %27, %28 : vector<8x32xf32>
    %30 = arith.addf %24, %29 : vector<8x32xf32>
    %c1_20 = arith.constant 1 : index
    %c0_21 = arith.constant 0 : index
    %c0_22 = arith.constant 0 : index
    %31 = vector.load %arg3[%c1_20, %c0_21, %c0_22] : memref<3x1x32xf32, #tpu.memory_space<vmem>>, vector<1x1x32xf32>
    %32 = vector.shape_cast %31 : vector<1x1x32xf32> to vector<1x32xf32>
    %33 = vector.broadcast %32 : vector<1x32xf32> to vector<8x32xf32>
    %34 = arith.addf %30, %33 : vector<8x32xf32>
    %c1_23 = arith.constant 1 : index
    %c0_24 = arith.constant 0 : index
    %c0_25 = arith.constant 0 : index
    %35 = vector.load %arg5[%c1_23, %c0_24, %c0_25] : memref<3x32x32xbf16, #tpu.memory_space<vmem>>, vector<1x32x32xbf16>
    %36 = vector.shape_cast %35 : vector<1x32x32xbf16> to vector<32x32xbf16>
    %cst_26 = arith.constant dense<0.000000e+00> : vector<8x32xf32>
    %37 = tpu.matmul %1, %36, %cst_26 {dimension_numbers = #tpu.dot_dimension_numbers<[1], [0], [0], [1], [0, 0, 1, 1], [], []>} : vector<8x32xbf16>, vector<32x32xbf16>, vector<8x32xf32> -> vector<8x32xf32>
    %c1_27 = arith.constant 1 : index
    %c0_28 = arith.constant 0 : index
    %c0_29 = arith.constant 0 : index
    %38 = vector.load %arg6[%c1_27, %c0_28, %c0_29] : memref<3x1x32xf32, #tpu.memory_space<vmem>>, vector<1x1x32xf32>
    %39 = vector.shape_cast %38 : vector<1x1x32xf32> to vector<1x32xf32>
    %40 = vector.broadcast %39 : vector<1x32xf32> to vector<8x32xf32>
    %41 = arith.addf %37, %40 : vector<8x32xf32>
    %42 = vector.extract_strided_slice %3 {offsets = [0, 2, 0], sizes = [8, 1, 32], strides = [1, 1, 1]} : vector<8x3x32xf32> to vector<8x1x32xf32>
    %43 = vector.shape_cast %42 : vector<8x1x32xf32> to vector<8x32xf32>
    %c2 = arith.constant 2 : index
    %c0_30 = arith.constant 0 : index
    %c0_31 = arith.constant 0 : index
    %44 = vector.load %arg2[%c2, %c0_30, %c0_31] : memref<3x1x32xf32, #tpu.memory_space<vmem>>, vector<1x1x32xf32>
    %45 = vector.shape_cast %44 : vector<1x1x32xf32> to vector<1x32xf32>
    %46 = vector.broadcast %2 : vector<8x1xf32> to vector<8x32xf32>
    %47 = vector.broadcast %45 : vector<1x32xf32> to vector<8x32xf32>
    %48 = arith.mulf %46, %47 : vector<8x32xf32>
    %49 = arith.addf %43, %48 : vector<8x32xf32>
    %c2_32 = arith.constant 2 : index
    %c0_33 = arith.constant 0 : index
    %c0_34 = arith.constant 0 : index
    %50 = vector.load %arg3[%c2_32, %c0_33, %c0_34] : memref<3x1x32xf32, #tpu.memory_space<vmem>>, vector<1x1x32xf32>
    %51 = vector.shape_cast %50 : vector<1x1x32xf32> to vector<1x32xf32>
    %52 = vector.broadcast %51 : vector<1x32xf32> to vector<8x32xf32>
    %53 = arith.addf %49, %52 : vector<8x32xf32>
    %c2_35 = arith.constant 2 : index
    %c0_36 = arith.constant 0 : index
    %c0_37 = arith.constant 0 : index
    %54 = vector.load %arg5[%c2_35, %c0_36, %c0_37] : memref<3x32x32xbf16, #tpu.memory_space<vmem>>, vector<1x32x32xbf16>
    %55 = vector.shape_cast %54 : vector<1x32x32xbf16> to vector<32x32xbf16>
    %cst_38 = arith.constant dense<0.000000e+00> : vector<8x32xf32>
    %56 = tpu.matmul %1, %55, %cst_38 {dimension_numbers = #tpu.dot_dimension_numbers<[1], [0], [0], [1], [0, 0, 1, 1], [], []>} : vector<8x32xbf16>, vector<32x32xbf16>, vector<8x32xf32> -> vector<8x32xf32>
    %c2_39 = arith.constant 2 : index
    %c0_40 = arith.constant 0 : index
    %c0_41 = arith.constant 0 : index
    %57 = vector.load %arg6[%c2_39, %c0_40, %c0_41] : memref<3x1x32xf32, #tpu.memory_space<vmem>>, vector<1x1x32xf32>
    %58 = vector.shape_cast %57 : vector<1x1x32xf32> to vector<1x32xf32>
    %59 = vector.broadcast %58 : vector<1x32xf32> to vector<8x32xf32>
    %60 = arith.addf %56, %59 : vector<8x32xf32>
    %61 = arith.addf %15, %22 : vector<8x32xf32>
    %62 = arith.negf %61 : vector<8x32xf32>
    %63 = math.exp %62 : vector<8x32xf32>
    %cst_42 = arith.constant 1.000000e+00 : f32
    %64 = vector.broadcast %cst_42 : f32 to vector<8x32xf32>
    %65 = arith.addf %64, %63 : vector<8x32xf32>
    %66 = arith.divf %64, %65 : vector<8x32xf32>
    %67 = arith.addf %34, %41 : vector<8x32xf32>
    %68 = arith.negf %67 : vector<8x32xf32>
    %69 = math.exp %68 : vector<8x32xf32>
    %cst_43 = arith.constant 1.000000e+00 : f32
    %70 = vector.broadcast %cst_43 : f32 to vector<8x32xf32>
    %71 = arith.addf %70, %69 : vector<8x32xf32>
    %72 = arith.divf %70, %71 : vector<8x32xf32>
    %73 = arith.mulf %66, %60 : vector<8x32xf32>
    %74 = arith.addf %53, %73 : vector<8x32xf32>
    %75 = math.tanh %74 : vector<8x32xf32>
    %cst_44 = arith.constant 1.000000e+00 : f32
    %76 = vector.broadcast %cst_44 : f32 to vector<8x32xf32>
    %77 = arith.subf %76, %72 : vector<8x32xf32>
    %78 = arith.mulf %77, %75 : vector<8x32xf32>
    %79 = arith.mulf %72, %0 : vector<8x32xf32>
    %80 = arith.addf %78, %79 : vector<8x32xf32>
    %c0_45 = arith.constant 0 : index
    %c0_46 = arith.constant 0 : index
    %81 = vector.load %arg7[%c0_45, %c0_46] : memref<8x32xf32, #tpu.memory_space<vmem>>, vector<8x32xf32>
    tpu.vector_store %arg7[%c0_45, %c0_46], %80 {strides = array<i32>} : memref<8x32xf32, #tpu.memory_space<vmem>>, vector<8x32xf32>,
    %82 = arith.truncf %80 : vector<8x32xf32> to vector<8x32xbf16>
    %c0_47 = arith.constant 0 : index
    %c0_48 = arith.constant 0 : index
    %83 = vector.load %arg8[%c0_47, %c0_48] : memref<8x32xbf16, #tpu.memory_space<vmem>>, vector<8x32xbf16>
    tpu.vector_store %arg8[%c0_47, %c0_48], %82 {strides = array<i32>} : memref<8x32xbf16, #tpu.memory_space<vmem>>, vector<8x32xbf16>,
    return
  }
}

</mosaic_0001>

<llo_original>
// kernel: tpu_custom_call.1
$region0: #{tpu_custom_call.1}
  #allocation0 [shape = 'u32[]', space=smem, size = 0x4, offset = 0x4, fixed_abs, tag = 'smem constant byte address 0x4 - core index']
  #allocation1 [shape = 'u32[144,128]{1,0:T(1,128)}', space=vmem, size = 0x12000, scoped, tag = 'internal scratch']
  %s0 = inlined_call_operand.vmem [shape: f32[8,3,32], index: 0, kind: input, shape index: {}]
  %s1 = inlined_call_operand.vmem [shape: f32[8,1], index: 1, kind: input, shape index: {}]
  %s2 = inlined_call_operand.vmem [shape: f32[3,1,32], index: 2, kind: input, shape index: {}]
  %s3 = inlined_call_operand.vmem [shape: f32[3,1,32], index: 3, kind: input, shape index: {}]
  %s4 = inlined_call_operand.vmem [shape: f32[8,32], index: 4, kind: input, shape index: {}]
  %s5 = inlined_call_operand.vmem [shape: bf16[3,32,32], index: 5, kind: input, shape index: {}]
  %s6 = inlined_call_operand.vmem [shape: f32[3,1,32], index: 6, kind: input, shape index: {}]
  %s7 = inlined_call_operand.hbm [shape: f32[8,32], index: 7, kind: output, shape index: {0}]
  %s8 = inlined_call_operand.hbm [shape: bf16[8,32], index: 8, kind: output, shape index: {1}]
  %9 = xla_tuple %s7, %s8
  %s10 = sld [smem:[#allocation0]]
  $region46: #{tpu_custom_call.1} parent=0
    _
  %s12 = ssub.s32 1, %s10
  %s13 = scalar_select 0, %s12, %s10
  $region1: #{tpu_custom_call.1} parent=0
    #allocation2 [shape = 'u8[4096]{0}', space=vmem, size = 0x1000, scoped, tag = 'output window, operand 0, single buffered']
    #allocation3 [shape = 's32[1]{0}', space=sflag, size = 0x4, scoped, tag = 'scoped memory for tpu_custom_call.1']
    #allocation4 [shape = 'u8[2048]{0}', space=vmem, size = 0x800, scoped, tag = 'output window, operand 1, single buffered']
    #allocation5 [shape = 's32[1]{0}', space=sflag, size = 0x4, scoped, tag = 'scoped memory for tpu_custom_call.1']
    %14 = vsyncpa [#allocation3], 0
    %15 = vsyncpa [#allocation5], 0
    // Predicated region
    $region2: #{tpu_custom_call.1} parent=1 // pred_check
      _
    $region3: #{tpu_custom_call.1} parent=1 // pred_check_branch
      %17 = sbr.rel (0) target = $region5
    $region4: #{tpu_custom_call.1} parent=1 // pred_region
      _
    $region5: #{tpu_custom_call.1} parent=1 // pred_fallthru
      _
    // Predicated region
    $region6: #{tpu_custom_call.1} parent=1 // pred_check
      _
    $region7: #{tpu_custom_call.1} parent=1 // pred_check_branch
      %19 = sbr.rel (0) target = $region9
    $region8: #{tpu_custom_call.1} parent=1 // pred_region
      _
    $region9: #{tpu_custom_call.1} parent=1 // pred_fallthru
      _
    // Predicated region
    $region10: #{tpu_custom_call.1} parent=1 // pred_check
      _
    $region11: #{tpu_custom_call.1} parent=1 // pred_check_branch
      %21 = sbr.rel (0) target = $region13
    $region12: #{tpu_custom_call.1} parent=1 // pred_region
      _
    $region13: #{tpu_custom_call.1} parent=1 // pred_fallthru
      _
    // Predicated region
    $region14: #{tpu_custom_call.1} parent=1 // pred_check
      _
    $region15: #{tpu_custom_call.1} parent=1 // pred_check_branch
      %23 = sbr.rel (0) target = $region17
    $region16: #{tpu_custom_call.1} parent=1 // pred_region
      _
    $region17: #{tpu_custom_call.1} parent=1 // pred_fallthru
      _
    // Predicated region
    $region18: #{tpu_custom_call.1} parent=1 // pred_check
      _
    $region19: #{tpu_custom_call.1} parent=1 // pred_check_branch
      %25 = sbr.rel (0) target = $region21
    $region20: #{tpu_custom_call.1} parent=1 // pred_region
      _
    $region21: #{tpu_custom_call.1} parent=1 // pred_fallthru
      _
    // Predicated region
    $region22: #{tpu_custom_call.1} parent=1 // pred_check
      _
    $region23: #{tpu_custom_call.1} parent=1 // pred_check_branch
      %27 = sbr.rel (0) target = $region25
    $region24: #{tpu_custom_call.1} parent=1 // pred_region
      _
    $region25: #{tpu_custom_call.1} parent=1 // pred_fallthru
      _
    // Predicated region
    $region26: #{tpu_custom_call.1} parent=1 // pred_check
      _
    $region27: #{tpu_custom_call.1} parent=1 // pred_check_branch
      %29 = sbr.rel (0) target = $region29
    $region28: #{tpu_custom_call.1} parent=1 // pred_region
      _
    $region29: #{tpu_custom_call.1} parent=1 // pred_fallthru
      _
    %v31 = vld [vmem:[%s4] sm:$0xff]
    %v32 = vpack.c.bf16 %v31, %v31
    %v33 = vld [vmem:[%s1] sm:$0xff]
    %v34 = vld [vmem:[%s0] sm:$0x7]
    %v35 = vld [vmem:[%s0 + $0x4] sm:$0x7]
    %v36 = vld [vmem:[%s0 + $0x8] sm:$0x7]
    %v37 = vld [vmem:[%s0 + $0xc] sm:$0x7]
    %v38 = vld [vmem:[%s0 + $0x10] sm:$0x7]
    %v39 = vld [vmem:[%s0 + $0x14] sm:$0x7]
    %v40 = vld [vmem:[%s0 + $0x18] sm:$0x7]
    %v41 = vld [vmem:[%s0 + $0x1c] sm:$0x7]
    %v42 = vld [vmem:[%s2] sm:$0x1]
    %44 = vset.pattern.permute.xlu0 0
    %45 = vperm.xlu0 %44, %v33
    %v46 = vpop.permute.xlu0 %45
    %v49 = vlaneseq
    %v50 = vshrl.u32 %v49, 7
    %v51 = vsub.s32 0, %v50
    %v52 = vrot.slane %v42, %v51
    %v54 = vmul.f32 %v46, %v52
    %v56 = vrot.slane %v54, 1
    %v57 = vrot.slane %v54, 2
    %v58 = vrot.slane %v54, 3
    %v59 = vrot.slane %v54, 4
    %v60 = vrot.slane %v54, 5
    %v61 = vrot.slane %v54, 6
    %v62 = vrot.slane %v54, 7
    %v71 = vadd.f32 %v34, %v54
    %v72 = vadd.f32 %v35, %v56
    %v73 = vadd.f32 %v36, %v57
    %v74 = vadd.f32 %v37, %v58
    %v75 = vadd.f32 %v38, %v59
    %v76 = vadd.f32 %v39, %v60
    %v77 = vadd.f32 %v40, %v61
    %v78 = vadd.f32 %v41, %v62
    %v79 = vld [vmem:[%s3] sm:$0x1]
    %v81 = vlaneseq
    %v82 = vshrl.u32 %v81, 7
    %v83 = vsub.s32 0, %v82
    %v84 = vrot.slane %v79, %v83
    %v86 = vadd.f32 %v71, %v84
    %v87 = vadd.f32 %v72, %v84
    %v88 = vadd.f32 %v73, %v84
    %v89 = vadd.f32 %v74, %v84
    %v90 = vadd.f32 %v75, %v84
    %v91 = vadd.f32 %v76, %v84
    %v92 = vadd.f32 %v77, %v84
    %v93 = vadd.f32 %v78, %v84
    %v94 = vld [vmem:[%s5] sm:$0xf]
    %v95 = vld [vmem:[%s5 + $0x4] sm:$0xf]
    %v96 = vld [vmem:[%s5 + $0x8] sm:$0xf]
    %v97 = vld [vmem:[%s5 + $0xc] sm:$0xf]
    %v98 = vld [vmem:[%s6] sm:$0x1]
    %v100 = vlaneseq
    %v101 = vshrl.u32 %v100, 7
    %v102 = vsub.s32 0, %v101
    %v103 = vrot.slane %v98, %v102
    %v109 = vunpack.c.l.b16 %v94
    %v110 = vunpack.c.l.b16 %v95
    %v111 = vunpack.c.l.b16 %v96
    %v112 = vunpack.c.l.b16 %v97
    %v113 = vpack.c.b16 %v110, %v109
    %v114 = vpack.c.b16 %v112, %v111
    %vm117 = vcmask 261120
    %v119 = vsel %vm117, %v32, 0
    %121 = vmatprep.subr.bf16.mxu0 0
    %122 = vmatpush1.bf16.msra.mxu0 %v113
    %123 = vmatprep.subr.bf16.mxu0 0
    %124 = vmatpush1.bf16.msra.mxu0 %v114
    %125 = vmatprep.subr.bf16.mxu0 0
    %126 = vmatpush1.bf16.msra.mxu0 0
    %127 = vmatprep.subr.bf16.mxu0 0
    %128 = vmatpush1.bf16.msra.mxu0 0
    %129 = vmatprep.subr.bf16.mxu0 0
    %130 = vmatpush1.bf16.msra.mxu0 0
    %131 = vmatprep.subr.bf16.mxu0 0
    %132 = vmatpush1.bf16.msra.mxu0 0
    %133 = vmatprep.subr.bf16.mxu0 0
    %134 = vmatpush1.bf16.msra.mxu0 0
    %135 = vmatprep.subr.bf16.mxu0 0
    %136 = vmatpush1.bf16.msra.mxu0 0
    %137 = vmatprep.subr.bf16.mxu0 0
    %138 = vmatpush1.bf16.msra.mxu0 0
    %139 = vmatprep.subr.bf16.mxu0 0
    %140 = vmatpush1.bf16.msra.mxu0 0
    %141 = vmatprep.subr.bf16.mxu0 0
    %142 = vmatpush1.bf16.msra.mxu0 0
    %143 = vmatprep.subr.bf16.mxu0 0
    %144 = vmatpush1.bf16.msra.mxu0 0
    %145 = vmatprep.subr.bf16.mxu0 0
    %146 = vmatpush1.bf16.msra.mxu0 0
    %147 = vmatprep.subr.bf16.mxu0 0
    %148 = vmatpush1.bf16.msra.mxu0 0
    %149 = vmatprep.subr.bf16.mxu0 0
    %150 = vmatpush1.bf16.msra.mxu0 0
    %151 = vmatprep.subr.bf16.mxu0 0
    %152 = vmatpush1.bf16.msra.mxu0 0
    %153 = vmatprep.mubr.bf16.mxu0 0
    %154 = vmatmul.mubr.bf16.gmra.mrb[0].mxu0 %v119
    %v155 = vpop.f32.mrb[0].mxu0
    %v156 = vadd.f32 %v103, %v155
    %v157 = vpop.f32.mrb[0].mxu0
    %v158 = vpop.f32.mrb[0].mxu0
    %v159 = vpop.f32.mrb[0].mxu0
    %160 = vdwg.mxu0
    %s161 = scalar_lea.vmem %s2, 1
    %v162 = vld [vmem:[%s161] sm:$0x1]
    %v164 = vlaneseq
    %v165 = vshrl.u32 %v164, 7
    %v166 = vsub.s32 0, %v165
    %v167 = vrot.slane %v162, %v166
    %v169 = vmul.f32 %v46, %v167
    %v171 = vrot.slane %v169, 7
    %v172 = vrot.slane %v169, 1
    %v173 = vrot.slane %v169, 2
    %v174 = vrot.slane %v169, 3
    %v175 = vrot.slane %v169, 4
    %v176 = vrot.slane %v169, 5
    %v177 = vrot.slane %v169, 6
    %v186 = vadd.f32 %v34, %v171
    %v187 = vadd.f32 %v35, %v169
    %v188 = vadd.f32 %v36, %v172
    %v189 = vadd.f32 %v37, %v173
    %v190 = vadd.f32 %v38, %v174
    %v191 = vadd.f32 %v39, %v175
    %v192 = vadd.f32 %v40, %v176
    %v193 = vadd.f32 %v41, %v177
    %s194 = scalar_lea.vmem %s3, 1
    %v195 = vld [vmem:[%s194] sm:$0x1]
    %v197 = vlaneseq
    %v198 = vshrl.u32 %v197, 7
    %v199 = vsub.s32 0, %v198
    %v200 = vrot.slane %v195, %v199
    %v202 = vadd.f32 %v186, %v200
    %v203 = vadd.f32 %v187, %v200
    %v204 = vadd.f32 %v188, %v200
    %v205 = vadd.f32 %v189, %v200
    %v206 = vadd.f32 %v190, %v200
    %v207 = vadd.f32 %v191, %v200
    %v208 = vadd.f32 %v192, %v200
    %v209 = vadd.f32 %v193, %v200
    %s210 = scalar_lea.vmem %s5, 16
    %v211 = vld [vmem:[%s210] sm:$0xf]
    %v212 = vld [vmem:[%s210 + $0x4] sm:$0xf]
    %v213 = vld [vmem:[%s210 + $0x8] sm:$0xf]
    %v214 = vld [vmem:[%s210 + $0xc] sm:$0xf]
    %s215 = scalar_lea.vmem %s6, 1
    %v216 = vld [vmem:[%s215] sm:$0x1]
    %v218 = vlaneseq
    %v219 = vshrl.u32 %v218, 7
    %v220 = vsub.s32 0, %v219
    %v221 = vrot.slane %v216, %v220
    %v227 = vunpack.c.l.b16 %v211
    %v228 = vunpack.c.l.b16 %v212
    %v229 = vunpack.c.l.b16 %v213
    %v230 = vunpack.c.l.b16 %v214
    %v231 = vpack.c.b16 %v228, %v227
    %v232 = vpack.c.b16 %v230, %v229
    %235 = vmatprep.subr.bf16.mxu0 0
    %236 = vmatpush1.bf16.msra.mxu0 %v231
    %237 = vmatprep.subr.bf16.mxu0 0
    %238 = vmatpush1.bf16.msra.mxu0 %v232
    %239 = vmatprep.subr.bf16.mxu0 0
    %240 = vmatpush1.bf16.msra.mxu0 0
    %241 = vmatprep.subr.bf16.mxu0 0
    %242 = vmatpush1.bf16.msra.mxu0 0
    %243 = vmatprep.subr.bf16.mxu0 0
    %244 = vmatpush1.bf16.msra.mxu0 0
    %245 = vmatprep.subr.bf16.mxu0 0
    %246 = vmatpush1.bf16.msra.mxu0 0
    %247 = vmatprep.subr.bf16.mxu0 0
    %248 = vmatpush1.bf16.msra.mxu0 0
    %249 = vmatprep.subr.bf16.mxu0 0
    %250 = vmatpush1.bf16.msra.mxu0 0
    %251 = vmatprep.subr.bf16.mxu0 0
    %252 = vmatpush1.bf16.msra.mxu0 0
    %253 = vmatprep.subr.bf16.mxu0 0
    %254 = vmatpush1.bf16.msra.mxu0 0
    %255 = vmatprep.subr.bf16.mxu0 0
    %256 = vmatpush1.bf16.msra.mxu0 0
    %257 = vmatprep.subr.bf16.mxu0 0
    %258 = vmatpush1.bf16.msra.mxu0 0
    %259 = vmatprep.subr.bf16.mxu0 0
    %260 = vmatpush1.bf16.msra.mxu0 0
    %261 = vmatprep.subr.bf16.mxu0 0
    %262 = vmatpush1.bf16.msra.mxu0 0
    %263 = vmatprep.subr.bf16.mxu0 0
    %264 = vmatpush1.bf16.msra.mxu0 0
    %265 = vmatprep.subr.bf16.mxu0 0
    %266 = vmatpush1.bf16.msra.mxu0 0
    %267 = vmatprep.mubr.bf16.mxu0 0
    %268 = vmatmul.mubr.bf16.gmra.mrb[0].mxu0 %v119
    %v269 = vpop.f32.mrb[0].mxu0
    %v270 = vadd.f32 %v221, %v269
    %v271 = vpop.f32.mrb[0].mxu0
    %v272 = vpop.f32.mrb[0].mxu0
    %v273 = vpop.f32.mrb[0].mxu0
    %274 = vdwg.mxu0
    %s275 = scalar_lea.vmem %s2, 2
    %v276 = vld [vmem:[%s275] sm:$0x1]
    %v278 = vlaneseq
    %v279 = vshrl.u32 %v278, 7
    %v280 = vsub.s32 0, %v279
    %v281 = vrot.slane %v276, %v280
    %v283 = vmul.f32 %v46, %v281
    %v285 = vrot.slane %v283, 6
    %v286 = vrot.slane %v283, 7
    %v287 = vrot.slane %v283, 1
    %v288 = vrot.slane %v283, 2
    %v289 = vrot.slane %v283, 3
    %v290 = vrot.slane %v283, 4
    %v291 = vrot.slane %v283, 5
    %v300 = vadd.f32 %v34, %v285
    %v301 = vadd.f32 %v35, %v286
    %v302 = vadd.f32 %v36, %v283
    %v303 = vadd.f32 %v37, %v287
    %v304 = vadd.f32 %v38, %v288
    %v305 = vadd.f32 %v39, %v289
    %v306 = vadd.f32 %v40, %v290
    %v307 = vadd.f32 %v41, %v291
    %s308 = scalar_lea.vmem %s3, 2
    %v309 = vld [vmem:[%s308] sm:$0x1]
    %v311 = vlaneseq
    %v312 = vshrl.u32 %v311, 7
    %v313 = vsub.s32 0, %v312
    %v314 = vrot.slane %v309, %v313
    %v316 = vadd.f32 %v300, %v314
    %v317 = vadd.f32 %v301, %v314
    %v318 = vadd.f32 %v302, %v314
    %v319 = vadd.f32 %v303, %v314
    %v320 = vadd.f32 %v304, %v314
    %v321 = vadd.f32 %v305, %v314
    %v322 = vadd.f32 %v306, %v314
    %v323 = vadd.f32 %v307, %v314
    %s324 = scalar_lea.vmem %s5, 32
    %v325 = vld [vmem:[%s324] sm:$0xf]
    %v326 = vld [vmem:[%s324 + $0x4] sm:$0xf]
    %v327 = vld [vmem:[%s324 + $0x8] sm:$0xf]
    %v328 = vld [vmem:[%s324 + $0xc] sm:$0xf]
    %s329 = scalar_lea.vmem %s6, 2
    %v330 = vld [vmem:[%s329] sm:$0x1]
    %v332 = vlaneseq
    %v333 = vshrl.u32 %v332, 7
    %v334 = vsub.s32 0, %v333
    %v335 = vrot.slane %v330, %v334
    %v341 = vunpack.c.l.b16 %v325
    %v342 = vunpack.c.l.b16 %v326
    %v343 = vunpack.c.l.b16 %v327
    %v344 = vunpack.c.l.b16 %v328
    %v345 = vpack.c.b16 %v342, %v341
    %v346 = vpack.c.b16 %v344, %v343
    %349 = vmatprep.subr.bf16.mxu0 0
    %350 = vmatpush1.bf16.msra.mxu0 %v345
    %351 = vmatprep.subr.bf16.mxu0 0
    %352 = vmatpush1.bf16.msra.mxu0 %v346
    %353 = vmatprep.subr.bf16.mxu0 0
    %354 = vmatpush1.bf16.msra.mxu0 0
    %355 = vmatprep.subr.bf16.mxu0 0
    %356 = vmatpush1.bf16.msra.mxu0 0
    %357 = vmatprep.subr.bf16.mxu0 0
    %358 = vmatpush1.bf16.msra.mxu0 0
    %359 = vmatprep.subr.bf16.mxu0 0
    %360 = vmatpush1.bf16.msra.mxu0 0
    %361 = vmatprep.subr.bf16.mxu0 0
    %362 = vmatpush1.bf16.msra.mxu0 0
    %363 = vmatprep.subr.bf16.mxu0 0
    %364 = vmatpush1.bf16.msra.mxu0 0
    %365 = vmatprep.subr.bf16.mxu0 0
    %366 = vmatpush1.bf16.msra.mxu0 0
    %367 = vmatprep.subr.bf16.mxu0 0
    %368 = vmatpush1.bf16.msra.mxu0 0
    %369 = vmatprep.subr.bf16.mxu0 0
    %370 = vmatpush1.bf16.msra.mxu0 0
    %371 = vmatprep.subr.bf16.mxu0 0
    %372 = vmatpush1.bf16.msra.mxu0 0
    %373 = vmatprep.subr.bf16.mxu0 0
    %374 = vmatpush1.bf16.msra.mxu0 0
    %375 = vmatprep.subr.bf16.mxu0 0
    %376 = vmatpush1.bf16.msra.mxu0 0
    %377 = vmatprep.subr.bf16.mxu0 0
    %378 = vmatpush1.bf16.msra.mxu0 0
    %379 = vmatprep.subr.bf16.mxu0 0
    %380 = vmatpush1.bf16.msra.mxu0 0
    %381 = vmatprep.mubr.bf16.mxu0 0
    %382 = vmatmul.mubr.bf16.gmra.mrb[0].mxu0 %v119
    %v383 = vpop.f32.mrb[0].mxu0
    %v384 = vadd.f32 %v335, %v383
    %v385 = vpop.f32.mrb[0].mxu0
    %v386 = vpop.f32.mrb[0].mxu0
    %v387 = vpop.f32.mrb[0].mxu0
    %388 = vdwg.mxu0
    %v390 = vrot.slane %v156, 1
    %v391 = vrot.slane %v156, 2
    %v392 = vrot.slane %v156, 3
    %v393 = vrot.slane %v156, 4
    %v394 = vrot.slane %v156, 5
    %v395 = vrot.slane %v156, 6
    %v396 = vrot.slane %v156, 7
    %v405 = vadd.f32 %v86, %v156
    %v406 = vadd.f32 %v87, %v390
    %v407 = vadd.f32 %v88, %v391
    %v408 = vadd.f32 %v89, %v392
    %v409 = vadd.f32 %v90, %v393
    %v410 = vadd.f32 %v91, %v394
    %v411 = vadd.f32 %v92, %v395
    %v412 = vadd.f32 %v93, %v396
    %v413 = vxor.u32 %v405, 2147483648
    %v414 = vxor.u32 %v406, 2147483648
    %v415 = vxor.u32 %v407, 2147483648
    %v416 = vxor.u32 %v408, 2147483648
    %v417 = vxor.u32 %v409, 2147483648
    %v418 = vxor.u32 %v410, 2147483648
    %v419 = vxor.u32 %v411, 2147483648
    %v420 = vxor.u32 %v412, 2147483648
    %v421 = vmul.f32 %v413, 1.442695
    %v422 = vpow.pop %v421
    %v423 = vmul.f32 %v414, 1.442695
    %v424 = vpow.pop %v423
    %v425 = vmul.f32 %v415, 1.442695
    %v426 = vpow.pop %v425
    %v427 = vmul.f32 %v416, 1.442695
    %v428 = vpow.pop %v427
    %v429 = vmul.f32 %v417, 1.442695
    %v430 = vpow.pop %v429
    %v431 = vmul.f32 %v418, 1.442695
    %v432 = vpow.pop %v431
    %v433 = vmul.f32 %v419, 1.442695
    %v434 = vpow.pop %v433
    %v435 = vmul.f32 %v420, 1.442695
    %v436 = vpow.pop %v435
    %v437 = vadd.f32 %v422, 1.0
    %v438 = vadd.f32 %v424, 1.0
    %v439 = vadd.f32 %v426, 1.0
    %v440 = vadd.f32 %v428, 1.0
    %v441 = vadd.f32 %v430, 1.0
    %v442 = vadd.f32 %v432, 1.0
    %v443 = vadd.f32 %v434, 1.0
    %v444 = vadd.f32 %v436, 1.0
    %v445 = vrcp.pop %v437
    %v446 = vmul.f32 1.0, %v445
    %v447 = vrcp.pop %v438
    %v448 = vmul.f32 1.0, %v447
    %v449 = vrcp.pop %v439
    %v450 = vmul.f32 1.0, %v449
    %v451 = vrcp.pop %v440
    %v452 = vmul.f32 1.0, %v451
    %v453 = vrcp.pop %v441
    %v454 = vmul.f32 1.0, %v453
    %v455 = vrcp.pop %v442
    %v456 = vmul.f32 1.0, %v455
    %v457 = vrcp.pop %v443
    %v458 = vmul.f32 1.0, %v457
    %v459 = vrcp.pop %v444
    %v460 = vmul.f32 1.0, %v459
    %v462 = vrot.slane %v270, 7
    %v463 = vrot.slane %v270, 1
    %v464 = vrot.slane %v270, 2
    %v465 = vrot.slane %v270, 3
    %v466 = vrot.slane %v270, 4
    %v467 = vrot.slane %v270, 5
    %v468 = vrot.slane %v270, 6
    %v477 = vadd.f32 %v202, %v462
    %v478 = vadd.f32 %v203, %v270
    %v479 = vadd.f32 %v204, %v463
    %v480 = vadd.f32 %v205, %v464
    %v481 = vadd.f32 %v206, %v465
    %v482 = vadd.f32 %v207, %v466
    %v483 = vadd.f32 %v208, %v467
    %v484 = vadd.f32 %v209, %v468
    %v485 = vxor.u32 %v477, 2147483648
    %v486 = vxor.u32 %v478, 2147483648
    %v487 = vxor.u32 %v479, 2147483648
    %v488 = vxor.u32 %v480, 2147483648
    %v489 = vxor.u32 %v481, 2147483648
    %v490 = vxor.u32 %v482, 2147483648
    %v491 = vxor.u32 %v483, 2147483648
    %v492 = vxor.u32 %v484, 2147483648
    %v493 = vmul.f32 %v485, 1.442695
    %v494 = vpow.pop %v493
    %v495 = vmul.f32 %v486, 1.442695
    %v496 = vpow.pop %v495
    %v497 = vmul.f32 %v487, 1.442695
    %v498 = vpow.pop %v497
    %v499 = vmul.f32 %v488, 1.442695
    %v500 = vpow.pop %v499
    %v501 = vmul.f32 %v489, 1.442695
    %v502 = vpow.pop %v501
    %v503 = vmul.f32 %v490, 1.442695
    %v504 = vpow.pop %v503
    %v505 = vmul.f32 %v491, 1.442695
    %v506 = vpow.pop %v505
    %v507 = vmul.f32 %v492, 1.442695
    %v508 = vpow.pop %v507
    %v509 = vadd.f32 %v494, 1.0
    %v510 = vadd.f32 %v496, 1.0
    %v511 = vadd.f32 %v498, 1.0
    %v512 = vadd.f32 %v500, 1.0
    %v513 = vadd.f32 %v502, 1.0
    %v514 = vadd.f32 %v504, 1.0
    %v515 = vadd.f32 %v506, 1.0
    %v516 = vadd.f32 %v508, 1.0
    %v517 = vrcp.pop %v509
    %v518 = vmul.f32 1.0, %v517
    %v519 = vrcp.pop %v510
    %v520 = vmul.f32 1.0, %v519
    %v521 = vrcp.pop %v511
    %v522 = vmul.f32 1.0, %v521
    %v523 = vrcp.pop %v512
    %v524 = vmul.f32 1.0, %v523
    %v525 = vrcp.pop %v513
    %v526 = vmul.f32 1.0, %v525
    %v527 = vrcp.pop %v514
    %v528 = vmul.f32 1.0, %v527
    %v529 = vrcp.pop %v515
    %v530 = vmul.f32 1.0, %v529
    %v531 = vrcp.pop %v516
    %v532 = vmul.f32 1.0, %v531
    %v534 = vrot.slane %v384, 1
    %v535 = vrot.slane %v384, 2
    %v536 = vrot.slane %v384, 3
    %v537 = vrot.slane %v384, 4
    %v538 = vrot.slane %v384, 5
    %v539 = vrot.slane %v384, 6
    %v540 = vrot.slane %v384, 7
    %v549 = vmul.f32 %v446, %v384
    %v550 = vmul.f32 %v448, %v534
    %v551 = vmul.f32 %v450, %v535
    %v552 = vmul.f32 %v452, %v536
    %v553 = vmul.f32 %v454, %v537
    %v554 = vmul.f32 %v456, %v538
    %v555 = vmul.f32 %v458, %v539
    %v556 = vmul.f32 %v460, %v540
    %v565 = vrot.slane %v549, 6
    %v566 = vrot.slane %v550, 6
    %v567 = vrot.slane %v551, 6
    %v568 = vrot.slane %v552, 6
    %v569 = vrot.slane %v553, 6
    %v570 = vrot.slane %v554, 6
    %v571 = vrot.slane %v555, 6
    %v572 = vrot.slane %v556, 6
    %v581 = vadd.f32 %v316, %v565
    %v582 = vadd.f32 %v317, %v566
    %v583 = vadd.f32 %v318, %v567
    %v584 = vadd.f32 %v319, %v568
    %v585 = vadd.f32 %v320, %v569
    %v586 = vadd.f32 %v321, %v570
    %v587 = vadd.f32 %v322, %v571
    %v588 = vadd.f32 %v323, %v572
    %v589 = vtanh.pop %v581
    %v590 = vtanh.pop %v582
    %v591 = vtanh.pop %v583
    %v592 = vtanh.pop %v584
    %v593 = vtanh.pop %v585
    %v594 = vtanh.pop %v586
    %v595 = vtanh.pop %v587
    %v596 = vtanh.pop %v588
    %v597 = vsub.f32 1.0, %v518
    %v598 = vsub.f32 1.0, %v520
    %v599 = vsub.f32 1.0, %v522
    %v600 = vsub.f32 1.0, %v524
    %v601 = vsub.f32 1.0, %v526
    %v602 = vsub.f32 1.0, %v528
    %v603 = vsub.f32 1.0, %v530
    %v604 = vsub.f32 1.0, %v532
    %v613 = vrot.slane %v589, 1
    %v614 = vrot.slane %v590, 1
    %v615 = vrot.slane %v591, 1
    %v616 = vrot.slane %v592, 1
    %v617 = vrot.slane %v593, 1
    %v618 = vrot.slane %v594, 1
    %v619 = vrot.slane %v595, 1
    %v620 = vrot.slane %v596, 1
    %v629 = vmul.f32 %v597, %v613
    %v630 = vmul.f32 %v598, %v614
    %v631 = vmul.f32 %v599, %v615
    %v632 = vmul.f32 %v600, %v616
    %v633 = vmul.f32 %v601, %v617
    %v634 = vmul.f32 %v602, %v618
    %v635 = vmul.f32 %v603, %v619
    %v636 = vmul.f32 %v604, %v620
    %v638 = vrot.slane %v31, 7
    %v639 = vrot.slane %v31, 1
    %v640 = vrot.slane %v31, 2
    %v641 = vrot.slane %v31, 3
    %v642 = vrot.slane %v31, 4
    %v643 = vrot.slane %v31, 5
    %v644 = vrot.slane %v31, 6
    %v653 = vmul.f32 %v518, %v638
    %v654 = vmul.f32 %v520, %v31
    %v655 = vmul.f32 %v522, %v639
    %v656 = vmul.f32 %v524, %v640
    %v657 = vmul.f32 %v526, %v641
    %v658 = vmul.f32 %v528, %v642
    %v659 = vmul.f32 %v530, %v643
    %v660 = vmul.f32 %v532, %v644
    %v661 = vadd.f32 %v629, %v653
    %v662 = vadd.f32 %v630, %v654
    %v663 = vadd.f32 %v631, %v655
    %v664 = vadd.f32 %v632, %v656
    %v665 = vadd.f32 %v633, %v657
    %v666 = vadd.f32 %v634, %v658
    %v667 = vadd.f32 %v635, %v659
    %v668 = vadd.f32 %v636, %v660
    %v677 = vrot.slane %v662, 7
    %vm678 = vcmask 1042434
    %v679 = vsel %vm678, %v677, %v661
    %v680 = vrot.slane %v663, 6
    %vm681 = vcmask 1043459
    %v682 = vsel %vm681, %v680, %v679
    %v683 = vrot.slane %v664, 5
    %vm684 = vcmask 1044484
    %v685 = vsel %vm684, %v683, %v682
    %v686 = vrot.slane %v665, 4
    %vm687 = vcmask 1045509
    %v688 = vsel %vm687, %v686, %v685
    %v689 = vrot.slane %v666, 3
    %vm690 = vcmask 1046534
    %v691 = vsel %vm690, %v689, %v688
    %v692 = vrot.slane %v667, 2
    %vm693 = vcmask 1047559
    %v694 = vsel %vm693, %v692, %v691
    %v695 = vrot.slane %v668, 1
    %vm698 = vcmask 261121
    %699 = vst.msk [vmem:[#allocation2 - $0x1] sm:$0xfe] %vm698, %v694
    %vm700 = vcmask 253952
    %701 = vst.msk [vmem:[#allocation2 + $0x7] sm:$0x1] %vm700, %v695
    %v702 = vpack.c.bf16 %v661, %v661
    %v703 = vpack.c.bf16 %v662, %v662
    %v704 = vpack.c.bf16 %v663, %v663
    %v705 = vpack.c.bf16 %v664, %v664
    %v706 = vpack.c.bf16 %v665, %v665
    %v707 = vpack.c.bf16 %v666, %v666
    %v708 = vpack.c.bf16 %v667, %v667
    %v709 = vpack.c.bf16 %v668, %v668
    %v718 = vunpack.c.l.b16 %v702
    %v719 = vunpack.c.l.b16 %v703
    %v720 = vunpack.c.l.b16 %v704
    %v721 = vunpack.c.l.b16 %v705
    %v722 = vunpack.c.l.b16 %v706
    %v723 = vunpack.c.l.b16 %v707
    %v724 = vunpack.c.l.b16 %v708
    %v725 = vunpack.c.l.b16 %v709
    %v726 = vpack.c.b16 %v718, %v718
    %v727 = vpack.c.b16 %v719, %v719
    %v728 = vpack.c.b16 %v720, %v720
    %v729 = vpack.c.b16 %v721, %v721
    %v730 = vpack.c.b16 %v722, %v722
    %v731 = vpack.c.b16 %v723, %v723
    %v732 = vpack.c.b16 %v724, %v724
    %v733 = vpack.c.b16 %v725, %v725
    %v734 = vunpack.c.l.b16 %v726
    %v735 = vunpack.c.l.b16 %v727
    %v736 = vunpack.c.l.b16 %v728
    %v737 = vunpack.c.l.b16 %v729
    %v738 = vunpack.c.l.b16 %v730
    %v739 = vunpack.c.l.b16 %v731
    %v740 = vunpack.c.l.b16 %v732
    %v741 = vunpack.c.l.b16 %v733
    %v742 = vrot.slane %v734, 1
    %vm743 = vcmask 1041409
    %v744 = vsel %vm743, %v735, %v742
    %v745 = vrot.slane %v736, 7
    %v746 = vsel %vm678, %v745, %v744
    %v747 = vrot.slane %v737, 6
    %v748 = vsel %vm681, %v747, %v746
    %v749 = vrot.slane %v738, 5
    %v750 = vsel %vm684, %v749, %v748
    %v751 = vrot.slane %v739, 4
    %v752 = vsel %vm687, %v751, %v750
    %v753 = vrot.slane %v740, 3
    %v754 = vsel %vm690, %v753, %v752
    %v755 = vrot.slane %v741, 2
    %v756 = vsel %vm693, %v755, %v754
    %v757 = vpack.c.b16 %v756, %v756
    %vm759 = vcmask 257024
    %760 = vst.msk [vmem:[#allocation4] sm:$0xf] %vm759, %v757
    // Predicated region
    $region30: #{tpu_custom_call.1} parent=1 // pred_check
      _
    $region31: #{tpu_custom_call.1} parent=1 // pred_check_branch
      %762 = sbr.rel (0) target = $region33
    $region32: #{tpu_custom_call.1} parent=1 // pred_region
      %s764 = ssub.s32 128, 128
      %765 = vsyncadd [#allocation3], %s764
      %s767 = sshll.u32 [#allocation2], 4
      %s768 = int_to_ptr.vmem [resolvable:$true] %s767
      %770 = dma.vmem_to_hbm [thread:$0]  %s768, 128, %s7, [#allocation3]
    $region33: #{tpu_custom_call.1} parent=1 // pred_fallthru
      _
    // Predicated region
    $region34: #{tpu_custom_call.1} parent=1 // pred_check
      _
    $region35: #{tpu_custom_call.1} parent=1 // pred_check_branch
      %772 = sbr.rel (0) target = $region37
    $region36: #{tpu_custom_call.1} parent=1 // pred_region
      %s774 = ssub.s32 64, 64
      %775 = vsyncadd [#allocation5], %s774
      %s777 = sshll.u32 [#allocation4], 4
      %s778 = int_to_ptr.vmem [resolvable:$true] %s777
      %780 = dma.vmem_to_hbm [thread:$0]  %s778, 64, %s8, [#allocation5]
    $region37: #{tpu_custom_call.1} parent=1 // pred_fallthru
      _
    // Predicated region
    $region38: #{tpu_custom_call.1} parent=1 // pred_check
      _
    $region39: #{tpu_custom_call.1} parent=1 // pred_check_branch
      %782 = sbr.rel (0) target = $region41
    $region40: #{tpu_custom_call.1} parent=1 // pred_region
      %783 = dma.done [#allocation3], 128
    $region41: #{tpu_custom_call.1} parent=1 // pred_fallthru
      _
    // Predicated region
    $region42: #{tpu_custom_call.1} parent=1 // pred_check
      _
    $region43: #{tpu_custom_call.1} parent=1 // pred_check_branch
      %785 = sbr.rel (0) target = $region45
    $region44: #{tpu_custom_call.1} parent=1 // pred_region
      %786 = dma.done [#allocation5], 64
    $region45: #{tpu_custom_call.1} parent=1 // pred_fallthru
      _
    %787 = vsyncpa [#allocation3], 1
    %788 = vsyncpa [#allocation5], 1

</llo_original>
